<compile_context>
chip_gen: v5e
topology: v5e:2x2
jax: 0.10.0
libtpu: 0.0.40
codegen_flags: <defaults>
</compile_context>

<pallas_src>
import jax
import jax.numpy as jnp
from jax.experimental import pallas as pl
from jax.experimental.pallas import tpu as pltpu

NODE_NUM = 64          # node_num
EMBEDDING_NUM = 128    # embedding_num (as in the reference script)
MAX_TILE = 512         # largest per-step row chunk for big workloads


def _embedding_kernel(idx_ref, table_ref, out_ref):
    # idx_ref:   VMEM (TILE, 1)   int32 node ids for this block
    # table_ref: VMEM (NODE_NUM, EMB) full fp32 embedding table
    # out_ref:   VMEM (TILE, EMB) gathered embeddings
    idx = idx_ref[...]                                    # (TILE, 1)
    tile = idx.shape[0]
    node_num = table_ref.shape[0]
    # one-hot gather on the MXU: (TILE, NODE_NUM) @ (NODE_NUM, EMB)
    iota = jax.lax.broadcasted_iota(jnp.int32, (tile, node_num), 1)
    one_hot = (iota == idx).astype(table_ref.dtype)       # exact 0/1 in fp32
    out_ref[...] = jnp.dot(
        one_hot, table_ref[...],
        preferred_element_type=jnp.float32).astype(out_ref.dtype)


def node_embedding_forward(table, targ):
    """emb = table[targ]  (PyTorch: self.em(targ))"""
    orig_shape = targ.shape
    idx = targ.reshape(-1, 1).astype(jnp.int32)
    n = idx.shape[0]
    node_num, emb_dim = table.shape

    # Single grid step for small n; chunk for large n (sublane-aligned).
    if n <= MAX_TILE:
        tile = n
    else:
        assert n % MAX_TILE == 0, "index count must be a multiple of MAX_TILE"
        tile = MAX_TILE

    out = pl.pallas_call(
        _embedding_kernel,
        out_shape=jax.ShapeDtypeStruct((n, emb_dim), table.dtype),
        grid=(n // tile,),
        in_specs=[
            pl.BlockSpec((tile, 1), lambda i: (i, 0)),
            # whole table resident in VMEM each step (tiny: 64x128 fp32 = 32 KiB)
            pl.BlockSpec((node_num, emb_dim), lambda i: (0, 0)),
        ],
        out_specs=pl.BlockSpec((tile, emb_dim), lambda i: (i, 0)),
        compiler_params=pltpu.CompilerParams(
            dimension_semantics=("parallel",)),
    )(idx, table)

    return out.reshape(*orig_shape, emb_dim)


if __name__ == "__main__":
    key = jax.random.PRNGKey(0)
    k_table, k_idx = jax.random.split(key)

    # nn.Embedding(node_num, embedding_num) default init: weight ~ N(0, 1)
    table = jax.random.normal(
        k_table, (NODE_NUM, EMBEDDING_NUM), dtype=jnp.float32)

    # targ: integer node ids, shape (batch=2, seq=8)
    targ = jax.random.randint(k_idx, (2, 8), 0, NODE_NUM, dtype=jnp.int32)

    emb = node_embedding_forward(table, targ)
    emb = jax.block_until_ready(emb)

    # correctness check vs. plain JAX gather (== torch nn.Embedding lookup)
    ref = table[targ]
    assert emb.shape == (2, 8, EMBEDDING_NUM)
    assert emb.dtype == jnp.float32
    assert jnp.allclose(emb, ref)

    print("KERNEL_OK")
</pallas_src>

<mosaic_0001>
module attributes {stable_mosaic.version = 11 : i64} {
  func.func @_embedding_kernel(%arg0: i32, %arg1: memref<16x1xi32, #tpu.memory_space<vmem>>, %arg2: memref<64x128xf32, #tpu.memory_space<vmem>>, %arg3: memref<16x128xf32, #tpu.memory_space<vmem>>) attributes {dimension_semantics = [#tpu.dimension_semantics<parallel>], iteration_bounds = array<i64: 1>, scalar_prefetch = 0 : i64, scratch_operands = 0 : i64, tpu.core_type = #tpu.core_type<tc>, window_params = [{transform_indices = @transform_0, window_bounds = array<i64: 16, 1>}, {pipeline_mode = #tpu.pipeline_mode<synchronous>, transform_indices = @transform_1, window_bounds = array<i64: 64, 128>}, {transform_indices = @transform_2, window_bounds = array<i64: 16, 128>}]} {
    %c0 = arith.constant 0 : index
    %c0_0 = arith.constant 0 : index
    %0 = vector.load %arg1[%c0, %c0_0] : memref<16x1xi32, #tpu.memory_space<vmem>>, vector<16x1xi32>
    %1 = tpu.iota {dimensions = array<i32: 1>} : vector<16x64xi32>
    %2 = vector.broadcast %0 : vector<16x1xi32> to vector<16x64xi32>
    %3 = arith.cmpi eq, %1, %2 : vector<16x64xi32>
    %4 = arith.extui %3 : vector<16x64xi1> to vector<16x64xi32>
    %5 = arith.sitofp %4 : vector<16x64xi32> to vector<16x64xf32>
    %c0_1 = arith.constant 0 : index
    %c0_2 = arith.constant 0 : index
    %6 = vector.load %arg2[%c0_1, %c0_2] : memref<64x128xf32, #tpu.memory_space<vmem>>, vector<64x128xf32>
    %cst = arith.constant dense<0.000000e+00> : vector<16x128xf32>
    %7 = tpu.matmul %5, %6, %cst {dimension_numbers = #tpu.dot_dimension_numbers<[1], [0], [0], [1], [0, 0, 1, 1], [], []>} : vector<16x64xf32>, vector<64x128xf32>, vector<16x128xf32> -> vector<16x128xf32>
    %c0_3 = arith.constant 0 : index
    %c0_4 = arith.constant 0 : index
    %8 = vector.load %arg3[%c0_3, %c0_4] : memref<16x128xf32, #tpu.memory_space<vmem>>, vector<16x128xf32>
    tpu.vector_store %arg3[%c0_3, %c0_4], %7 {strides = array<i32>} : memref<16x128xf32, #tpu.memory_space<vmem>>, vector<16x128xf32>,
    return
  }
  func.func @transform_0(%arg0: i32) -> (i32, i32) {
    %c0_i32 = arith.constant 0 : i32
    %c0_i32_0 = arith.constant 0 : i32
    return %arg0, %c0_i32 : i32, i32
  }
  func.func @transform_1(%arg0: i32) -> (i32, i32) {
    %c0_i32 = arith.constant 0 : i32
    %c0_i32_0 = arith.constant 0 : i32
    %c0_i32_1 = arith.constant 0 : i32
    return %c0_i32, %c0_i32_0 : i32, i32
  }
  func.func @transform_2(%arg0: i32) -> (i32, i32) {
    %c0_i32 = arith.constant 0 : i32
    %c0_i32_0 = arith.constant 0 : i32
    return %arg0, %c0_i32 : i32, i32
  }
}

</mosaic_0001>

<llo_original>
// kernel: tpu_custom_call.1
$region0: #{tpu_custom_call.1}
  #allocation0 [shape = 'u32[]', space=smem, size = 0x4, offset = 0x4, fixed_abs, tag = 'smem constant byte address 0x4 - core index']
  #allocation1 [shape = 'u32[72,128]{1,0:T(1,128)}', space=vmem, size = 0x9000, scoped, tag = 'internal scratch']
  %s0 = inlined_call_operand.vmem [shape: s32[16,1], index: 0, kind: input, shape index: {}]
  %s1 = inlined_call_operand.hbm [shape: f32[64,128], index: 1, kind: input, shape index: {}]
  %s2 = inlined_call_operand.hbm [shape: f32[16,128], index: 2, kind: output, shape index: {}]
  %s3 = sld [smem:[#allocation0]]
  $region22: #{tpu_custom_call.1} parent=0
    _
  %s5 = ssub.s32 1, %s3
  %s6 = scalar_select 0, %s5, %s3
  $region1: #{tpu_custom_call.1} parent=0
    #allocation2 [shape = 'u8[32768]{0}', space=vmem, size = 0x8000, scoped, tag = 'input window, operand 1, single buffered']
    #allocation3 [shape = 's32[1]{0}', space=sflag, size = 0x4, scoped, tag = 'scoped memory for tpu_custom_call.1']
    #allocation4 [shape = 's32[1]{0}', space=sflag, size = 0x4, scoped, tag = 'scoped memory for tpu_custom_call.1']
    #allocation5 [shape = 'u8[8192]{0}', space=vmem, size = 0x2000, scoped, tag = 'output window, operand 0, single buffered']
    %7 = vsyncpa [#allocation3], 0
    %8 = vsyncpa [#allocation4], 0
    // Predicated region
    $region2: #{tpu_custom_call.1} parent=1 // pred_check
      _
    $region3: #{tpu_custom_call.1} parent=1 // pred_check_branch
      %10 = sbr.rel (0) target = $region5
    $region4: #{tpu_custom_call.1} parent=1 // pred_region
      _
    $region5: #{tpu_custom_call.1} parent=1 // pred_fallthru
      _
    // Predicated region
    $region6: #{tpu_custom_call.1} parent=1 // pred_check
      _
    $region7: #{tpu_custom_call.1} parent=1 // pred_check_branch
      %12 = sbr.rel (0) target = $region9
    $region8: #{tpu_custom_call.1} parent=1 // pred_region
      %14 = vsyncadd [#allocation3], 0
      %s15 = sshll.u32 %s1, 4
      %s16 = int_to_ptr.hbm [resolvable:$true] %s15
      %s17 = sshll.u32 [#allocation2], 4
      %s18 = int_to_ptr.vmem [resolvable:$true] %s17
      %23 = dma.hbm_to_vmem [thread:$0]  %s16, 1024, %s18, [#allocation3], 128, 128, 8
    $region9: #{tpu_custom_call.1} parent=1 // pred_fallthru
      _
    // Predicated region
    $region10: #{tpu_custom_call.1} parent=1 // pred_check
      _
    $region11: #{tpu_custom_call.1} parent=1 // pred_check_branch
      %25 = sbr.rel (0) target = $region13
    $region12: #{tpu_custom_call.1} parent=1 // pred_region
      %27 = dma.done [#allocation3], 1024
    $region13: #{tpu_custom_call.1} parent=1 // pred_fallthru
      _
    %v28 = vld [vmem:[%s0] sm:$0xff]
    %v29 = vld [vmem:[%s0 + $0x8] sm:$0xff]
    %v30 = vlaneseq
    %v31 = vand.u32 %v30, 127
    %32 = vset.pattern.permute.xlu0 0
    %33 = vperm.xlu0 %32, %v28
    %v34 = vpop.permute.xlu0 %33
    %35 = vset.pattern.permute.xlu0 0
    %36 = vperm.xlu0 %35, %v29
    %v37 = vpop.permute.xlu0 %36
    %vm38 = vcmp.eq.s32.totalorder %v31, %v34
    %vm39 = vcmp.eq.s32.totalorder %v31, %v37
    %v40 = vsel %vm38, 1, 0
    %v41 = vsel %vm39, 1, 0
    %v42 = vcvt.s32.f32 %v40
    %v43 = vcvt.s32.f32 %v41
    %v44 = vld [vmem:[#allocation2] sm:$0xff]
    %v45 = vld [vmem:[#allocation2 + $0x8] sm:$0xff]
    %v46 = vld [vmem:[#allocation2 + $0x10] sm:$0xff]
    %v47 = vld [vmem:[#allocation2 + $0x18] sm:$0xff]
    %v48 = vld [vmem:[#allocation2 + $0x20] sm:$0xff]
    %v49 = vld [vmem:[#allocation2 + $0x28] sm:$0xff]
    %v50 = vld [vmem:[#allocation2 + $0x30] sm:$0xff]
    %v51 = vld [vmem:[#allocation2 + $0x38] sm:$0xff]
    %vm52 = vcmask 523264
    %v54 = vsel %vm52, %v42, 0
    %v57 = vsel %vm52, %v43, 0
    %59 = vmatpush.msra.mxu0 0.0
    %60 = vmatpush.msra.mxu0 0.0
    %61 = vmatpush.msra.mxu0 0.0
    %62 = vmatpush.msra.mxu0 0.0
    %63 = vmatpush.msra.mxu0 0.0
    %64 = vmatpush.msra.mxu0 0.0
    %65 = vmatpush.msra.mxu0 0.0
    %66 = vmatpush.msra.mxu0 0.0
    %67 = vmatpush.msra.mxu0 %v51
    %68 = vmatpush.msra.mxu0 %v50
    %69 = vmatpush.msra.mxu0 %v49
    %70 = vmatpush.msra.mxu0 %v48
    %71 = vmatpush.msra.mxu0 %v47
    %72 = vmatpush.msra.mxu0 %v46
    %73 = vmatpush.msra.mxu0 %v45
    %74 = vmatpush.msra.mxu0 %v44
    %75 = vmatmul.f32.gmra.mxu0 %v54
    %v76 = vpop.f32.mrf.mxu0
    %v77 = vadd.f32 0.0, %v76
    %78 = vmatmul.f32.gmra.mxu0 %v57
    %v79 = vpop.f32.mrf.mxu0
    %v80 = vadd.f32 0.0, %v79
    %81 = vdwg.mxu0
    %82 = vst [vmem:[#allocation5] sm:$0xff] %v77
    %83 = vst [vmem:[#allocation5 + $0x8] sm:$0xff] %v80
    // Predicated region
    $region14: #{tpu_custom_call.1} parent=1 // pred_check
      _
    $region15: #{tpu_custom_call.1} parent=1 // pred_check_branch
      %85 = sbr.rel (0) target = $region17
    $region16: #{tpu_custom_call.1} parent=1 // pred_region
      %87 = vsyncadd [#allocation4], 0
      %s88 = sshll.u32 [#allocation5], 4
      %s89 = int_to_ptr.vmem [resolvable:$true] %s88
      %s90 = sshll.u32 %s2, 4
      %s91 = int_to_ptr.hbm [resolvable:$true] %s90
      %96 = dma.vmem_to_hbm [thread:$0]  %s89, 256, %s91, [#allocation4], 128, 128, 8
    $region17: #{tpu_custom_call.1} parent=1 // pred_fallthru
      _
    // Predicated region
    $region18: #{tpu_custom_call.1} parent=1 // pred_check
      _
    $region19: #{tpu_custom_call.1} parent=1 // pred_check_branch
      %98 = sbr.rel (0) target = $region21
    $region20: #{tpu_custom_call.1} parent=1 // pred_region
      %100 = dma.done [#allocation4], 256
    $region21: #{tpu_custom_call.1} parent=1 // pred_fallthru
      _
    %101 = vsyncpa [#allocation3], 1
    %102 = vsyncpa [#allocation4], 1

</llo_original>
